<compile_context>
chip_gen: v5e
topology: v5e:2x2
jax: 0.10.0
libtpu: 0.0.40
codegen_flags: <defaults>
</compile_context>

<pallas_src>
import jax
import jax.numpy as jnp
from jax.experimental import pallas as pl
from jax.experimental.pallas import tpu as pltpu


def _identity_copy_kernel(x_hbm, o_hbm, sem):
    """Copy the full tensor with a single HBM->HBM DMA (no VMEM round trip)."""
    copy = pltpu.make_async_copy(x_hbm, o_hbm, sem)
    copy.start()
    copy.wait()


def bert_clf_forward(features: jax.Array) -> jax.Array:
    """Pallas implementation of BERTClf.forward.

    The module is a pure identity, so the fastest correct implementation on
    every TPU generation is to return the input untouched (no HBM traffic,
    no kernel launch).
    """
    return features


def bert_clf_forward_copy(features: jax.Array) -> jax.Array:
    """Identity that materializes a *fresh* output buffer via one HBM->HBM DMA.

    Use only when a distinct output buffer is explicitly required; otherwise
    prefer `bert_clf_forward`, which is free.
    """
    # Degenerate inputs: nothing worth DMAing.
    if features.ndim == 0 or features.size == 0:
        return features

    nbytes = features.size * features.dtype.itemsize
    return pl.pallas_call(
        _identity_copy_kernel,
        out_shape=jax.ShapeDtypeStruct(features.shape, features.dtype),
        grid=(1,),
        # Keep both operands in HBM (no auto HBM<->VMEM tiling); the kernel
        # body moves the bytes with a single DMA.
        in_specs=[pl.BlockSpec(memory_space=pl.ANY)],
        out_specs=pl.BlockSpec(memory_space=pl.ANY),
        scratch_shapes=[pltpu.SemaphoreType.DMA],
        # Accurate hint for XLA's scheduler: one full read + one full write.
        cost_estimate=pl.CostEstimate(
            flops=0, transcendentals=0, bytes_accessed=2 * nbytes
        ),
    )(features)


if __name__ == "__main__":
    key = jax.random.PRNGKey(0)
    k1, k2 = jax.random.split(key, 2)

    # Small shape consistent with the module (batch=2, hidden=32).
    feats = jax.random.normal(k1, (2, 32), dtype=jnp.float32)

    # 1) Module-equivalent path: pure identity (zero cost).
    out_fast = jax.block_until_ready(bert_clf_forward(feats))
    assert out_fast.shape == feats.shape and out_fast.dtype == feats.dtype
    assert bool(jnp.all(out_fast == feats))

    # 2) Explicit-kernel path: single HBM->HBM DMA copy, run once and blocked on.
    out_copy = jax.block_until_ready(bert_clf_forward_copy(feats))
    assert out_copy.shape == feats.shape and out_copy.dtype == feats.dtype
    assert bool(jnp.all(out_copy == feats))

    # 3) Slightly larger features still go through the same single-DMA path
    #    (no grid split on any generation per the perf review).
    feats2 = jax.random.normal(k2, (64, 768), dtype=jnp.float32)
    out2 = jax.block_until_ready(bert_clf_forward_copy(feats2))
    assert out2.shape == feats2.shape and out2.dtype == feats2.dtype
    assert bool(jnp.all(out2 == feats2))

    print("KERNEL_OK")
</pallas_src>

<mosaic_0001>
module attributes {stable_mosaic.version = 11 : i64} {
  func.func @_identity_copy_kernel(%arg0: i32, %arg1: memref<2x32xf32, #tpu.memory_space<any>>, %arg2: memref<2x32xf32, #tpu.memory_space<any>>, %arg3: memref<!tpu.dma_semaphore, #tpu.memory_space<semaphore_mem>>) attributes {dimension_semantics = [#tpu.dimension_semantics<arbitrary>], iteration_bounds = array<i64: 1>, scalar_prefetch = 0 : i64, scratch_operands = 1 : i64, tpu.core_type = #tpu.core_type<tc>, window_params = [{}, {}]} {
    tpu.enqueue_dma source(%arg1 : memref<2x32xf32, #tpu.memory_space<any>>) target(%arg2 : memref<2x32xf32, #tpu.memory_space<any>>) target_semaphore(%arg3 : memref<!tpu.dma_semaphore, #tpu.memory_space<semaphore_mem>>)
    tpu.wait_dma2 semaphore(%arg3 : memref<!tpu.dma_semaphore, #tpu.memory_space<semaphore_mem>>) src(%arg1 : memref<2x32xf32, #tpu.memory_space<any>>) dst(%arg2 : memref<2x32xf32, #tpu.memory_space<any>>)
    return
  }
}

</mosaic_0001>

<llo_original>
// kernel: tpu_custom_call.1
$region0: #{tpu_custom_call.1}
  #allocation0 [shape = 'u32[]', space=smem, size = 0x4, offset = 0x4, fixed_abs, tag = 'smem constant byte address 0x4 - core index']
  #allocation1 [shape = 'u32[72,128]{1,0:T(1,128)}', space=vmem, size = 0x9000, scoped, tag = 'internal scratch']
  #allocation2 [shape = 's32[1]{0}', space=sflag, size = 0x4, scoped, tag = 'scratch operand']
  #allocation3 [shape = 's32[]', space=sflag, size = 0x4, offset = 0, fixed_abs, tag = 'sflag constant byte address 0x0 - dummy sync flag']
  #allocation4 [shape = 'u32[0]{0}', space=smem, size = 0, offset = 0, fixed_abs, tag = 'smem constant byte address 0x0 - null']
  %s0 = inlined_call_operand.hbm [shape: f32[2,32], index: 0, kind: input, shape index: {}]
  %s1 = inlined_call_operand.hbm [shape: f32[2,32], index: 1, kind: output, shape index: {}]
  %s2 = sld [smem:[#allocation0]]
  $region2: #{tpu_custom_call.1} parent=0
    _
  %s4 = ssub.s32 1, %s2
  %s5 = scalar_select 0, %s4, %s2
  %s7 = sshll.u32 1, 14
  %s8 = sxor.u32 4294967295, %s7
  %s10 = sshll.u32 %s0, 4
  %s11 = int_to_ptr.hbm [resolvable:$true] %s10
  %s12 = sshll.u32 %s1, 4
  %s13 = int_to_ptr.hbm [resolvable:$true] %s12
  %16 = dma.general %s11, 32, %s13, [#allocation2], [#allocation3], [#allocation4], 0, 0
  %s17 = smul.u32 2, 1
  %s18 = sshll.u32 %s17, 4
  %19 = dma.done [#allocation2], %s18
  %20 = vsyncmov [#allocation2]
  %s21 = vpop.sfrf %20
  %p22 = scmp.eq.s32.totalorder %s21, 0
  %p23 = pneg %p22
  %25 = shalt.err (%p23)

</llo_original>
